<compile_context>
chip_gen: v5e
topology: v5e:2x2
jax: 0.10.0
libtpu: 0.0.40
codegen_flags: <defaults>
</compile_context>

<pallas_src>
import jax
import jax.numpy as jnp
import numpy as np
from jax.experimental import pallas as pl
from jax.experimental.pallas import tpu as pltpu


def _round_up(x, m):
    return ((x + m - 1) // m) * m


def _normalized_stress_kernel(start_ref, end_ref, d_ref, eg_ref, sizes_ref,
                              out_ref, s1_acc, s2_acc, cnt_acc):
    # start_ref/end_ref: [D, TR, 128] f32  edge endpoints (edge axis dense)
    # d_ref:             [TR, 128]    f32  graph-theoretic distances (pad = 1.0)
    # eg_ref:            [TR, 128]    i32  edge -> graph id (pad = -1)
    # sizes_ref:         [G, 1]       f32  nodes per graph
    # out_ref:           [1, 1]       f32  mean normalized stress
    # s1/s2/cnt_acc:     [G, 128]     f32  per-graph lane-wise partial sums
    step = pl.program_id(0)
    num_dims = start_ref.shape[0]
    num_graphs = sizes_ref.shape[0]

    @pl.when(step == 0)
    def _init():
        s1_acc[...] = jnp.zeros_like(s1_acc)
        s2_acc[...] = jnp.zeros_like(s2_acc)
        cnt_acc[...] = jnp.zeros_like(cnt_acc)

    # Squared edge length, unrolled over the tiny static coordinate dim.
    eu2 = None
    for dd in range(num_dims):
        diff = start_ref[dd] - end_ref[dd]              # [TR, 128]
        sq = diff * diff
        eu2 = sq if eu2 is None else eu2 + sq
    eu = jnp.sqrt(eu2)                                  # [TR, 128]  (EUP)
    ratio = eu / d_ref[...]                             # [TR, 128]  (EUP recip + mul)

    eg = eg_ref[...]                                    # [TR, 128] int32

    # Per-graph masked partial sums; padded edges carry id -1 and never match.
    # Static unroll keeps every op a dense rank-2 vreg op.
    for g in range(num_graphs):
        m = (eg == g).astype(jnp.float32)               # [TR, 128]
        mr = m * ratio                                  # masked ratio
        s1_acc[pl.ds(g, 1), :] += jnp.sum(mr, axis=0, keepdims=True)
        s2_acc[pl.ds(g, 1), :] += jnp.sum(mr * ratio, axis=0, keepdims=True)
        cnt_acc[pl.ds(g, 1), :] += jnp.sum(m, axis=0, keepdims=True)

    @pl.when(step == pl.num_programs(0) - 1)
    def _finalize():
        s1 = jnp.sum(s1_acc[...], axis=1, keepdims=True)     # [G, 1]
        s2 = jnp.sum(s2_acc[...], axis=1, keepdims=True)     # [G, 1]
        cnt = jnp.sum(cnt_acc[...], axis=1, keepdims=True)   # [G, 1]
        scale = s2 / s1                                       # [G, 1]
        inv_scale = 1.0 / scale
        # sum_e ((ratio/scale) - 1)^2 = s2/scale^2 - 2*s1/scale + count
        graph_stress = s2 * inv_scale * inv_scale - 2.0 * s1 * inv_scale + cnt
        sizes = sizes_ref[...]                                # [G, 1]
        graph_stress = graph_stress / (sizes * sizes)
        out_ref[...] = (jnp.sum(graph_stress, axis=0, keepdims=True)
                        * (1.0 / num_graphs))                 # [1, 1]


def normalized_stress(node_pos, full_edge_index, full_edge_attr, batch_vec,
                      num_graphs, *, max_tile_rows=512):
    """JAX wrapper reproducing NormalizedStress.forward with reduce=mean."""
    node_pos = node_pos.astype(jnp.float32)
    E = full_edge_index.shape[1]
    D = node_pos.shape[1]
    G = int(num_graphs)

    # ---- index plumbing (gathers / padding / tiny per-graph sizes) ----
    start = node_pos[full_edge_index[0]].T                        # [D, E]
    end = node_pos[full_edge_index[1]].T                          # [D, E]
    d = full_edge_attr[:, 0].astype(jnp.float32)                  # [E]
    edge_graph = batch_vec[full_edge_index[0]].astype(jnp.int32)  # [E]
    sizes = jax.ops.segment_sum(
        jnp.ones_like(batch_vec, dtype=jnp.float32), batch_vec,
        num_segments=G).reshape(G, 1)                             # [G, 1]

    # Pad the edge axis so it is lane- and sublane-dense and tiles evenly.
    rows_needed = -(-E // 128)
    tile_rows = min(max_tile_rows, _round_up(rows_needed, 8))
    total_rows = _round_up(rows_needed, tile_rows)
    e_padded = total_rows * 128
    pad = e_padded - E

    start = jnp.pad(start, ((0, 0), (0, pad))).reshape(D, total_rows, 128)
    end = jnp.pad(end, ((0, 0), (0, pad))).reshape(D, total_rows, 128)
    d = jnp.pad(d, (0, pad), constant_values=1.0).reshape(total_rows, 128)
    edge_graph = jnp.pad(edge_graph, (0, pad),
                         constant_values=-1).reshape(total_rows, 128)

    grid = (total_rows // tile_rows,)

    out = pl.pallas_call(
        _normalized_stress_kernel,
        out_shape=jax.ShapeDtypeStruct((1, 1), jnp.float32),
        grid=grid,
        in_specs=[
            pl.BlockSpec((D, tile_rows, 128), lambda i: (0, i, 0)),
            pl.BlockSpec((D, tile_rows, 128), lambda i: (0, i, 0)),
            pl.BlockSpec((tile_rows, 128), lambda i: (i, 0)),
            pl.BlockSpec((tile_rows, 128), lambda i: (i, 0)),
            pl.BlockSpec((G, 1), lambda i: (0, 0)),
        ],
        out_specs=pl.BlockSpec((1, 1), lambda i: (0, 0)),
        scratch_shapes=[
            pltpu.VMEM((G, 128), jnp.float32),
            pltpu.VMEM((G, 128), jnp.float32),
            pltpu.VMEM((G, 128), jnp.float32),
        ],
        compiler_params=pltpu.CompilerParams(
            dimension_semantics=("arbitrary",)),
    )(start, end, d, edge_graph, sizes)
    return out[0, 0]


def _reference(node_pos, full_edge_index, full_edge_attr, batch_vec, num_graphs):
    """Pure-JAX reference mirroring the PyTorch module (for sanity check)."""
    start = node_pos[full_edge_index[0]]
    end = node_pos[full_edge_index[1]]
    eu = jnp.linalg.norm(start - end, axis=1)
    d = full_edge_attr[:, 0]
    idx = batch_vec[full_edge_index[0]]
    s2 = jax.ops.segment_sum((eu / d) ** 2, idx, num_segments=num_graphs)
    s1 = jax.ops.segment_sum(eu / d, idx, num_segments=num_graphs)
    scale = s2 / s1
    scaled_pos = node_pos / scale[batch_vec][:, None]
    start = scaled_pos[full_edge_index[0]]
    end = scaled_pos[full_edge_index[1]]
    eu = jnp.linalg.norm(start - end, axis=1)
    edge_stress = ((eu - d) / d) ** 2
    graph_stress = jax.ops.segment_sum(edge_stress, idx, num_segments=num_graphs)
    sizes = jax.ops.segment_sum(jnp.ones_like(batch_vec, dtype=jnp.float32),
                                batch_vec, num_segments=num_graphs)
    graph_stress = graph_stress / (sizes * sizes)
    return jnp.mean(graph_stress)


if __name__ == "__main__":
    key = jax.random.PRNGKey(0)

    # Two graphs of 8 nodes each (N=16), 2-D layout positions, full edge set
    # (all ordered pairs i != j within each graph): E = 2 * 8 * 7 = 112.
    nodes_per_graph = 8
    num_graphs = 2
    N = nodes_per_graph * num_graphs
    D = 2

    node_pos = jax.random.normal(key, (N, D), dtype=jnp.float32)
    batch_vec = jnp.repeat(jnp.arange(num_graphs, dtype=jnp.int32), nodes_per_graph)

    # Build full_edge_index and graph-theoretic distances d = |i - j| (path graph).
    srcs, dsts, dists = [], [], []
    for g in range(num_graphs):
        base = g * nodes_per_graph
        for i in range(nodes_per_graph):
            for j in range(nodes_per_graph):
                if i != j:
                    srcs.append(base + i)
                    dsts.append(base + j)
                    dists.append(abs(i - j))
    full_edge_index = jnp.array([srcs, dsts], dtype=jnp.int32)          # [2, E]
    full_edge_attr = jnp.array(dists, dtype=jnp.float32)[:, None]       # [E, 1]

    out = normalized_stress(node_pos, full_edge_index, full_edge_attr,
                            batch_vec, num_graphs)
    out = jax.block_until_ready(out)

    ref = _reference(node_pos, full_edge_index, full_edge_attr, batch_vec, num_graphs)
    np.testing.assert_allclose(np.asarray(out), np.asarray(ref), rtol=1e-4, atol=1e-6)

    print("KERNEL_OK")
</pallas_src>

<mosaic_0001>
module attributes {stable_mosaic.version = 11 : i64} {
  func.func @_normalized_stress_kernel(%arg0: i32, %arg1: memref<2x8x128xf32, #tpu.memory_space<vmem>>, %arg2: memref<2x8x128xf32, #tpu.memory_space<vmem>>, %arg3: memref<8x128xf32, #tpu.memory_space<vmem>>, %arg4: memref<8x128xi32, #tpu.memory_space<vmem>>, %arg5: memref<2x1xf32, #tpu.memory_space<vmem>>, %arg6: memref<1x1xf32, #tpu.memory_space<vmem>>, %arg7: memref<2x128xf32, #tpu.memory_space<vmem>>, %arg8: memref<2x128xf32, #tpu.memory_space<vmem>>, %arg9: memref<2x128xf32, #tpu.memory_space<vmem>>) attributes {dimension_semantics = [#tpu.dimension_semantics<arbitrary>], iteration_bounds = array<i64: 1>, scalar_prefetch = 0 : i64, scratch_operands = 3 : i64, tpu.core_type = #tpu.core_type<tc>, window_params = [{transform_indices = @transform_0, window_bounds = array<i64: 2, 8, 128>}, {transform_indices = @transform_1, window_bounds = array<i64: 2, 8, 128>}, {transform_indices = @transform_2, window_bounds = array<i64: 8, 128>}, {transform_indices = @transform_3, window_bounds = array<i64: 8, 128>}, {pipeline_mode = #tpu.pipeline_mode<synchronous>, transform_indices = @transform_4, window_bounds = array<i64: 2, 1>}, {pipeline_mode = #tpu.pipeline_mode<synchronous>, transform_indices = @transform_5, window_bounds = array<i64: 1, 1>}]} {
    %c0_i32 = arith.constant 0 : i32
    %0 = arith.cmpi eq, %arg0, %c0_i32 : i32
    %1 = arith.extui %0 : i1 to i32
    %c0_i32_0 = arith.constant 0 : i32
    %2 = arith.cmpi ne, %1, %c0_i32_0 : i32
    scf.if %2 {
      %cst_47 = arith.constant 0.000000e+00 : f32
      %65 = vector.broadcast %cst_47 : f32 to vector<2x128xf32>
      %c0_48 = arith.constant 0 : index
      %c0_49 = arith.constant 0 : index
      %66 = vector.load %arg7[%c0_48, %c0_49] : memref<2x128xf32, #tpu.memory_space<vmem>>, vector<2x128xf32>
      tpu.vector_store %arg7[%c0_48, %c0_49], %65 {strides = array<i32>} : memref<2x128xf32, #tpu.memory_space<vmem>>, vector<2x128xf32>,
      %cst_50 = arith.constant 0.000000e+00 : f32
      %67 = vector.broadcast %cst_50 : f32 to vector<2x128xf32>
      %c0_51 = arith.constant 0 : index
      %c0_52 = arith.constant 0 : index
      %68 = vector.load %arg8[%c0_51, %c0_52] : memref<2x128xf32, #tpu.memory_space<vmem>>, vector<2x128xf32>
      tpu.vector_store %arg8[%c0_51, %c0_52], %67 {strides = array<i32>} : memref<2x128xf32, #tpu.memory_space<vmem>>, vector<2x128xf32>,
      %cst_53 = arith.constant 0.000000e+00 : f32
      %69 = vector.broadcast %cst_53 : f32 to vector<2x128xf32>
      %c0_54 = arith.constant 0 : index
      %c0_55 = arith.constant 0 : index
      %70 = vector.load %arg9[%c0_54, %c0_55] : memref<2x128xf32, #tpu.memory_space<vmem>>, vector<2x128xf32>
      tpu.vector_store %arg9[%c0_54, %c0_55], %69 {strides = array<i32>} : memref<2x128xf32, #tpu.memory_space<vmem>>, vector<2x128xf32>,
    } else {
    }
    %c0 = arith.constant 0 : index
    %c0_1 = arith.constant 0 : index
    %c0_2 = arith.constant 0 : index
    %3 = vector.load %arg1[%c0, %c0_1, %c0_2] : memref<2x8x128xf32, #tpu.memory_space<vmem>>, vector<1x8x128xf32>
    %4 = vector.shape_cast %3 : vector<1x8x128xf32> to vector<8x128xf32>
    %c0_3 = arith.constant 0 : index
    %c0_4 = arith.constant 0 : index
    %c0_5 = arith.constant 0 : index
    %5 = vector.load %arg2[%c0_3, %c0_4, %c0_5] : memref<2x8x128xf32, #tpu.memory_space<vmem>>, vector<1x8x128xf32>
    %6 = vector.shape_cast %5 : vector<1x8x128xf32> to vector<8x128xf32>
    %7 = arith.subf %4, %6 : vector<8x128xf32>
    %8 = arith.mulf %7, %7 : vector<8x128xf32>
    %c1 = arith.constant 1 : index
    %c0_6 = arith.constant 0 : index
    %c0_7 = arith.constant 0 : index
    %9 = vector.load %arg1[%c1, %c0_6, %c0_7] : memref<2x8x128xf32, #tpu.memory_space<vmem>>, vector<1x8x128xf32>
    %10 = vector.shape_cast %9 : vector<1x8x128xf32> to vector<8x128xf32>
    %c1_8 = arith.constant 1 : index
    %c0_9 = arith.constant 0 : index
    %c0_10 = arith.constant 0 : index
    %11 = vector.load %arg2[%c1_8, %c0_9, %c0_10] : memref<2x8x128xf32, #tpu.memory_space<vmem>>, vector<1x8x128xf32>
    %12 = vector.shape_cast %11 : vector<1x8x128xf32> to vector<8x128xf32>
    %13 = arith.subf %10, %12 : vector<8x128xf32>
    %14 = arith.mulf %13, %13 : vector<8x128xf32>
    %15 = arith.addf %8, %14 : vector<8x128xf32>
    %16 = math.sqrt %15 : vector<8x128xf32>
    %c0_11 = arith.constant 0 : index
    %c0_12 = arith.constant 0 : index
    %17 = vector.load %arg3[%c0_11, %c0_12] : memref<8x128xf32, #tpu.memory_space<vmem>>, vector<8x128xf32>
    %18 = arith.divf %16, %17 : vector<8x128xf32>
    %c0_13 = arith.constant 0 : index
    %c0_14 = arith.constant 0 : index
    %19 = vector.load %arg4[%c0_13, %c0_14] : memref<8x128xi32, #tpu.memory_space<vmem>>, vector<8x128xi32>
    %c0_i32_15 = arith.constant 0 : i32
    %20 = vector.broadcast %c0_i32_15 : i32 to vector<8x128xi32>
    %21 = arith.cmpi eq, %19, %20 : vector<8x128xi32>
    %22 = arith.extui %21 : vector<8x128xi1> to vector<8x128xi32>
    %23 = arith.sitofp %22 : vector<8x128xi32> to vector<8x128xf32>
    %24 = arith.mulf %23, %18 : vector<8x128xf32>
    %c0_16 = arith.constant 0 : index
    %c0_17 = arith.constant 0 : index
    %25 = vector.load %arg7[%c0_16, %c0_17] : memref<2x128xf32, #tpu.memory_space<vmem>>, vector<1x128xf32>
    %cst = arith.constant dense<0.000000e+00> : vector<128xf32>
    %26 = vector.multi_reduction <add>, %24, %cst [0] : vector<8x128xf32> to vector<128xf32>
    %27 = vector.shape_cast %26 : vector<128xf32> to vector<1x128xf32>
    %28 = arith.addf %25, %27 : vector<1x128xf32>
    %c0_18 = arith.constant 0 : index
    %c0_19 = arith.constant 0 : index
    %29 = vector.load %arg7[%c0_18, %c0_19] : memref<2x128xf32, #tpu.memory_space<vmem>>, vector<1x128xf32>
    tpu.vector_store %arg7[%c0_18, %c0_19], %28 {strides = array<i32>} : memref<2x128xf32, #tpu.memory_space<vmem>>, vector<1x128xf32>,
    %c0_20 = arith.constant 0 : index
    %c0_21 = arith.constant 0 : index
    %30 = vector.load %arg8[%c0_20, %c0_21] : memref<2x128xf32, #tpu.memory_space<vmem>>, vector<1x128xf32>
    %31 = arith.mulf %24, %18 : vector<8x128xf32>
    %cst_22 = arith.constant dense<0.000000e+00> : vector<128xf32>
    %32 = vector.multi_reduction <add>, %31, %cst_22 [0] : vector<8x128xf32> to vector<128xf32>
    %33 = vector.shape_cast %32 : vector<128xf32> to vector<1x128xf32>
    %34 = arith.addf %30, %33 : vector<1x128xf32>
    %c0_23 = arith.constant 0 : index
    %c0_24 = arith.constant 0 : index
    %35 = vector.load %arg8[%c0_23, %c0_24] : memref<2x128xf32, #tpu.memory_space<vmem>>, vector<1x128xf32>
    tpu.vector_store %arg8[%c0_23, %c0_24], %34 {strides = array<i32>} : memref<2x128xf32, #tpu.memory_space<vmem>>, vector<1x128xf32>,
    %c0_25 = arith.constant 0 : index
    %c0_26 = arith.constant 0 : index
    %36 = vector.load %arg9[%c0_25, %c0_26] : memref<2x128xf32, #tpu.memory_space<vmem>>, vector<1x128xf32>
    %cst_27 = arith.constant dense<0.000000e+00> : vector<128xf32>
    %37 = vector.multi_reduction <add>, %23, %cst_27 [0] : vector<8x128xf32> to vector<128xf32>
    %38 = vector.shape_cast %37 : vector<128xf32> to vector<1x128xf32>
    %39 = arith.addf %36, %38 : vector<1x128xf32>
    %c0_28 = arith.constant 0 : index
    %c0_29 = arith.constant 0 : index
    %40 = vector.load %arg9[%c0_28, %c0_29] : memref<2x128xf32, #tpu.memory_space<vmem>>, vector<1x128xf32>
    tpu.vector_store %arg9[%c0_28, %c0_29], %39 {strides = array<i32>} : memref<2x128xf32, #tpu.memory_space<vmem>>, vector<1x128xf32>,
    %c1_i32 = arith.constant 1 : i32
    %41 = vector.broadcast %c1_i32 : i32 to vector<8x128xi32>
    %42 = arith.cmpi eq, %19, %41 : vector<8x128xi32>
    %43 = arith.extui %42 : vector<8x128xi1> to vector<8x128xi32>
    %44 = arith.sitofp %43 : vector<8x128xi32> to vector<8x128xf32>
    %45 = arith.mulf %44, %18 : vector<8x128xf32>
    %c1_30 = arith.constant 1 : index
    %c0_31 = arith.constant 0 : index
    %46 = vector.load %arg7[%c1_30, %c0_31] : memref<2x128xf32, #tpu.memory_space<vmem>>, vector<1x128xf32>
    %cst_32 = arith.constant dense<0.000000e+00> : vector<128xf32>
    %47 = vector.multi_reduction <add>, %45, %cst_32 [0] : vector<8x128xf32> to vector<128xf32>
    %48 = vector.shape_cast %47 : vector<128xf32> to vector<1x128xf32>
    %49 = arith.addf %46, %48 : vector<1x128xf32>
    %c1_33 = arith.constant 1 : index
    %c0_34 = arith.constant 0 : index
    %50 = vector.load %arg7[%c1_33, %c0_34] : memref<2x128xf32, #tpu.memory_space<vmem>>, vector<1x128xf32>
    tpu.vector_store %arg7[%c1_33, %c0_34], %49 {strides = array<i32>} : memref<2x128xf32, #tpu.memory_space<vmem>>, vector<1x128xf32>,
    %c1_35 = arith.constant 1 : index
    %c0_36 = arith.constant 0 : index
    %51 = vector.load %arg8[%c1_35, %c0_36] : memref<2x128xf32, #tpu.memory_space<vmem>>, vector<1x128xf32>
    %52 = arith.mulf %45, %18 : vector<8x128xf32>
    %cst_37 = arith.constant dense<0.000000e+00> : vector<128xf32>
    %53 = vector.multi_reduction <add>, %52, %cst_37 [0] : vector<8x128xf32> to vector<128xf32>
    %54 = vector.shape_cast %53 : vector<128xf32> to vector<1x128xf32>
    %55 = arith.addf %51, %54 : vector<1x128xf32>
    %c1_38 = arith.constant 1 : index
    %c0_39 = arith.constant 0 : index
    %56 = vector.load %arg8[%c1_38, %c0_39] : memref<2x128xf32, #tpu.memory_space<vmem>>, vector<1x128xf32>
    tpu.vector_store %arg8[%c1_38, %c0_39], %55 {strides = array<i32>} : memref<2x128xf32, #tpu.memory_space<vmem>>, vector<1x128xf32>,
    %c1_40 = arith.constant 1 : index
    %c0_41 = arith.constant 0 : index
    %57 = vector.load %arg9[%c1_40, %c0_41] : memref<2x128xf32, #tpu.memory_space<vmem>>, vector<1x128xf32>
    %cst_42 = arith.constant dense<0.000000e+00> : vector<128xf32>
    %58 = vector.multi_reduction <add>, %44, %cst_42 [0] : vector<8x128xf32> to vector<128xf32>
    %59 = vector.shape_cast %58 : vector<128xf32> to vector<1x128xf32>
    %60 = arith.addf %57, %59 : vector<1x128xf32>
    %c1_43 = arith.constant 1 : index
    %c0_44 = arith.constant 0 : index
    %61 = vector.load %arg9[%c1_43, %c0_44] : memref<2x128xf32, #tpu.memory_space<vmem>>, vector<1x128xf32>
    tpu.vector_store %arg9[%c1_43, %c0_44], %60 {strides = array<i32>} : memref<2x128xf32, #tpu.memory_space<vmem>>, vector<1x128xf32>,
    %c0_i32_45 = arith.constant 0 : i32
    %62 = arith.cmpi eq, %arg0, %c0_i32_45 : i32
    %63 = arith.extui %62 : i1 to i32
    %c0_i32_46 = arith.constant 0 : i32
    %64 = arith.cmpi ne, %63, %c0_i32_46 : i32
    scf.if %64 {
      %c0_47 = arith.constant 0 : index
      %c0_48 = arith.constant 0 : index
      %65 = vector.load %arg7[%c0_47, %c0_48] : memref<2x128xf32, #tpu.memory_space<vmem>>, vector<2x128xf32>
      %cst_49 = arith.constant dense<0.000000e+00> : vector<2xf32>
      %66 = vector.multi_reduction <add>, %65, %cst_49 [1] : vector<2x128xf32> to vector<2xf32>
      %67 = vector.shape_cast %66 : vector<2xf32> to vector<2x1xf32>
      %c0_50 = arith.constant 0 : index
      %c0_51 = arith.constant 0 : index
      %68 = vector.load %arg8[%c0_50, %c0_51] : memref<2x128xf32, #tpu.memory_space<vmem>>, vector<2x128xf32>
      %cst_52 = arith.constant dense<0.000000e+00> : vector<2xf32>
      %69 = vector.multi_reduction <add>, %68, %cst_52 [1] : vector<2x128xf32> to vector<2xf32>
      %70 = vector.shape_cast %69 : vector<2xf32> to vector<2x1xf32>
      %c0_53 = arith.constant 0 : index
      %c0_54 = arith.constant 0 : index
      %71 = vector.load %arg9[%c0_53, %c0_54] : memref<2x128xf32, #tpu.memory_space<vmem>>, vector<2x128xf32>
      %cst_55 = arith.constant dense<0.000000e+00> : vector<2xf32>
      %72 = vector.multi_reduction <add>, %71, %cst_55 [1] : vector<2x128xf32> to vector<2xf32>
      %73 = vector.shape_cast %72 : vector<2xf32> to vector<2x1xf32>
      %74 = arith.divf %70, %67 : vector<2x1xf32>
      %cst_56 = arith.constant 1.000000e+00 : f32
      %75 = vector.broadcast %cst_56 : f32 to vector<2x1xf32>
      %76 = arith.divf %75, %74 : vector<2x1xf32>
      %77 = arith.mulf %70, %76 : vector<2x1xf32>
      %78 = arith.mulf %77, %76 : vector<2x1xf32>
      %cst_57 = arith.constant 2.000000e+00 : f32
      %79 = vector.broadcast %cst_57 : f32 to vector<2x1xf32>
      %80 = arith.mulf %79, %67 : vector<2x1xf32>
      %81 = arith.mulf %80, %76 : vector<2x1xf32>
      %82 = arith.subf %78, %81 : vector<2x1xf32>
      %83 = arith.addf %82, %73 : vector<2x1xf32>
      %c0_58 = arith.constant 0 : index
      %c0_59 = arith.constant 0 : index
      %84 = vector.load %arg5[%c0_58, %c0_59] : memref<2x1xf32, #tpu.memory_space<vmem>>, vector<2x1xf32>
      %85 = arith.mulf %84, %84 : vector<2x1xf32>
      %86 = arith.divf %83, %85 : vector<2x1xf32>
      %cst_60 = arith.constant dense<0.000000e+00> : vector<1xf32>
      %87 = vector.multi_reduction <add>, %86, %cst_60 [0] : vector<2x1xf32> to vector<1xf32>
      %88 = vector.shape_cast %87 : vector<1xf32> to vector<1x1xf32>
      %cst_61 = arith.constant 5.000000e-01 : f32
      %89 = vector.broadcast %cst_61 : f32 to vector<1x1xf32>
      %90 = arith.mulf %88, %89 : vector<1x1xf32>
      %c0_62 = arith.constant 0 : index
      %c0_63 = arith.constant 0 : index
      %91 = vector.load %arg6[%c0_62, %c0_63] : memref<1x1xf32, #tpu.memory_space<vmem>>, vector<1x1xf32>
      tpu.vector_store %arg6[%c0_62, %c0_63], %90 {strides = array<i32>} : memref<1x1xf32, #tpu.memory_space<vmem>>, vector<1x1xf32>,
    } else {
    }
    return
  }
  func.func @transform_0(%arg0: i32) -> (i32, i32, i32) {
    %c0_i32 = arith.constant 0 : i32
    %c0_i32_0 = arith.constant 0 : i32
    %c0_i32_1 = arith.constant 0 : i32
    return %c0_i32, %arg0, %c0_i32_0 : i32, i32, i32
  }
  func.func @transform_1(%arg0: i32) -> (i32, i32, i32) {
    %c0_i32 = arith.constant 0 : i32
    %c0_i32_0 = arith.constant 0 : i32
    %c0_i32_1 = arith.constant 0 : i32
    return %c0_i32, %arg0, %c0_i32_0 : i32, i32, i32
  }
  func.func @transform_2(%arg0: i32) -> (i32, i32) {
    %c0_i32 = arith.constant 0 : i32
    %c0_i32_0 = arith.constant 0 : i32
    return %arg0, %c0_i32 : i32, i32
  }
  func.func @transform_3(%arg0: i32) -> (i32, i32) {
    %c0_i32 = arith.constant 0 : i32
    %c0_i32_0 = arith.constant 0 : i32
    return %arg0, %c0_i32 : i32, i32
  }
  func.func @transform_4(%arg0: i32) -> (i32, i32) {
    %c0_i32 = arith.constant 0 : i32
    %c0_i32_0 = arith.constant 0 : i32
    %c0_i32_1 = arith.constant 0 : i32
    return %c0_i32, %c0_i32_0 : i32, i32
  }
  func.func @transform_5(%arg0: i32) -> (i32, i32) {
    %c0_i32 = arith.constant 0 : i32
    %c0_i32_0 = arith.constant 0 : i32
    %c0_i32_1 = arith.constant 0 : i32
    return %c0_i32, %c0_i32_0 : i32, i32
  }
}

</mosaic_0001>

<llo_original>
// kernel: tpu_custom_call.1
$region0: #{tpu_custom_call.1}
  #allocation0 [shape = 'u32[]', space=smem, size = 0x4, offset = 0x4, fixed_abs, tag = 'smem constant byte address 0x4 - core index']
  #allocation1 [shape = 'u32[72,128]{1,0:T(1,128)}', space=vmem, size = 0x9000, scoped, tag = 'internal scratch']
  #allocation2 [shape = 'f32[2,128]{1,0:T(2,128)}', space=vmem, size = 0x400, scoped, tag = 'scratch operand']
  #allocation3 [shape = 'f32[2,128]{1,0:T(2,128)}', space=vmem, size = 0x400, scoped, tag = 'scratch operand']
  #allocation4 [shape = 'f32[2,128]{1,0:T(2,128)}', space=vmem, size = 0x400, scoped, tag = 'scratch operand']
  %s0 = inlined_call_operand.hbm [shape: f32[2,8,128], index: 0, kind: input, shape index: {}]
  %s1 = inlined_call_operand.hbm [shape: f32[2,8,128], index: 1, kind: input, shape index: {}]
  %s2 = inlined_call_operand.hbm [shape: f32[8,128], index: 2, kind: input, shape index: {}]
  %s3 = inlined_call_operand.hbm [shape: s32[8,128], index: 3, kind: input, shape index: {}]
  %s4 = inlined_call_operand.vmem [shape: f32[2,1], index: 4, kind: input, shape index: {}]
  %s5 = inlined_call_operand.hbm [shape: f32[1,1], index: 5, kind: output, shape index: {}]
  %s6 = sld [smem:[#allocation0]]
  $region54: #{tpu_custom_call.1} parent=0
    _
  %s8 = ssub.s32 1, %s6
  %s9 = scalar_select 0, %s8, %s6
  $region1: #{tpu_custom_call.1} parent=0
    #allocation5 [shape = 'u8[8192]{0}', space=vmem, size = 0x2000, scoped, tag = 'input window, operand 0, single buffered']
    #allocation6 [shape = 's32[1]{0}', space=sflag, size = 0x4, scoped, tag = 'scoped memory for tpu_custom_call.1']
    #allocation7 [shape = 's32[1]{0}', space=sflag, size = 0x4, scoped, tag = 'scoped memory for tpu_custom_call.1']
    #allocation8 [shape = 'u8[8192]{0}', space=vmem, size = 0x2000, scoped, tag = 'input window, operand 1, single buffered']
    #allocation9 [shape = 's32[1]{0}', space=sflag, size = 0x4, scoped, tag = 'scoped memory for tpu_custom_call.1']
    #allocation10 [shape = 'u8[4096]{0}', space=vmem, size = 0x1000, scoped, tag = 'input window, operand 2, single buffered']
    #allocation11 [shape = 'u8[4096]{0}', space=vmem, size = 0x1000, scoped, tag = 'input window, operand 3, single buffered']
    #allocation12 [shape = 's32[1]{0}', space=sflag, size = 0x4, scoped, tag = 'scoped memory for tpu_custom_call.1']
    #allocation13 [shape = 'u8[512]{0}', space=vmem, size = 0x400, scoped, tag = 'output window, operand 0, single buffered']
    %10 = vsyncpa [#allocation6], 0
    %11 = vsyncpa [#allocation9], 0
    %12 = vsyncpa [#allocation12], 0
    %13 = vsyncpa [#allocation7], 0
    // Predicated region
    $region2: #{tpu_custom_call.1} parent=1 // pred_check
      _
    $region3: #{tpu_custom_call.1} parent=1 // pred_check_branch
      %15 = sbr.rel (0) target = $region5
    $region4: #{tpu_custom_call.1} parent=1 // pred_region
      %17 = vsyncadd [#allocation6], 0
      %s18 = sshll.u32 %s0, 4
      %s19 = int_to_ptr.hbm [resolvable:$true] %s18
      %s20 = sshll.u32 [#allocation5], 4
      %s21 = int_to_ptr.vmem [resolvable:$true] %s20
      %26 = dma.hbm_to_vmem [thread:$0]  %s19, 256, %s21, [#allocation6], 128, 128, 8
    $region5: #{tpu_custom_call.1} parent=1 // pred_fallthru
      _
    // Predicated region
    $region6: #{tpu_custom_call.1} parent=1 // pred_check
      _
    $region7: #{tpu_custom_call.1} parent=1 // pred_check_branch
      %28 = sbr.rel (0) target = $region9
    $region8: #{tpu_custom_call.1} parent=1 // pred_region
      %30 = vsyncadd [#allocation9], 0
      %s31 = sshll.u32 %s1, 4
      %s32 = int_to_ptr.hbm [resolvable:$true] %s31
      %s33 = sshll.u32 [#allocation8], 4
      %s34 = int_to_ptr.vmem [resolvable:$true] %s33
      %39 = dma.hbm_to_vmem [thread:$0]  %s32, 256, %s34, [#allocation9], 128, 128, 8
    $region9: #{tpu_custom_call.1} parent=1 // pred_fallthru
      _
    // Predicated region
    $region10: #{tpu_custom_call.1} parent=1 // pred_check
      _
    $region11: #{tpu_custom_call.1} parent=1 // pred_check_branch
      %41 = sbr.rel (0) target = $region13
    $region12: #{tpu_custom_call.1} parent=1 // pred_region
      %43 = vsyncadd [#allocation9], 0
      %s45 = sshll.u32 %s2, 4
      %s46 = int_to_ptr.hbm [resolvable:$true] %s45
      %s47 = sshll.u32 [#allocation10], 4
      %s48 = int_to_ptr.vmem [resolvable:$true] %s47
      %50 = dma.hbm_to_vmem [thread:$0]  %s46, 128, %s48, [#allocation9]
    $region13: #{tpu_custom_call.1} parent=1 // pred_fallthru
      _
    // Predicated region
    $region14: #{tpu_custom_call.1} parent=1 // pred_check
      _
    $region15: #{tpu_custom_call.1} parent=1 // pred_check_branch
      %52 = sbr.rel (0) target = $region17
    $region16: #{tpu_custom_call.1} parent=1 // pred_region
      %54 = vsyncadd [#allocation12], 0
      %s56 = sshll.u32 %s3, 4
      %s57 = int_to_ptr.hbm [resolvable:$true] %s56
      %s58 = sshll.u32 [#allocation11], 4
      %s59 = int_to_ptr.vmem [resolvable:$true] %s58
      %61 = dma.hbm_to_vmem [thread:$0]  %s57, 128, %s59, [#allocation12]
    $region17: #{tpu_custom_call.1} parent=1 // pred_fallthru
      _
    // Predicated region
    $region18: #{tpu_custom_call.1} parent=1 // pred_check
      _
    $region19: #{tpu_custom_call.1} parent=1 // pred_check_branch
      %63 = sbr.rel (0) target = $region21
    $region20: #{tpu_custom_call.1} parent=1 // pred_region
      _
    $region21: #{tpu_custom_call.1} parent=1 // pred_fallthru
      _
    // Predicated region
    $region22: #{tpu_custom_call.1} parent=1 // pred_check
      _
    $region23: #{tpu_custom_call.1} parent=1 // pred_check_branch
      %65 = sbr.rel (0) target = $region25
    $region24: #{tpu_custom_call.1} parent=1 // pred_region
      %67 = dma.done [#allocation6], 256
    $region25: #{tpu_custom_call.1} parent=1 // pred_fallthru
      _
    // Predicated region
    $region26: #{tpu_custom_call.1} parent=1 // pred_check
      _
    $region27: #{tpu_custom_call.1} parent=1 // pred_check_branch
      %69 = sbr.rel (0) target = $region29
    $region28: #{tpu_custom_call.1} parent=1 // pred_region
      %71 = dma.done [#allocation9], 256
    $region29: #{tpu_custom_call.1} parent=1 // pred_fallthru
      _
    // Predicated region
    $region30: #{tpu_custom_call.1} parent=1 // pred_check
      _
    $region31: #{tpu_custom_call.1} parent=1 // pred_check_branch
      %73 = sbr.rel (0) target = $region33
    $region32: #{tpu_custom_call.1} parent=1 // pred_region
      %75 = dma.done [#allocation9], 128
    $region33: #{tpu_custom_call.1} parent=1 // pred_fallthru
      _
    // Predicated region
    $region34: #{tpu_custom_call.1} parent=1 // pred_check
      _
    $region35: #{tpu_custom_call.1} parent=1 // pred_check_branch
      %77 = sbr.rel (0) target = $region37
    $region36: #{tpu_custom_call.1} parent=1 // pred_region
      %79 = dma.done [#allocation12], 128
    $region37: #{tpu_custom_call.1} parent=1 // pred_fallthru
      _
    %p80 = scmp.eq.s32.totalorder 0, 0
    // Predicated region
    $region38: #{tpu_custom_call.1} parent=1 // pred_check
      %p81 = pneg %p80
    $region39: #{tpu_custom_call.1} parent=1 // pred_check_branch
      %83 = sbr.rel (%p81) target = $region41
    $region40: #{tpu_custom_call.1} parent=1 // pred_region
      %84 = vst [vmem:[#allocation2] sm:$0x3] 0.0
      %85 = vst [vmem:[#allocation3] sm:$0x3] 0.0
      %86 = vst [vmem:[#allocation4] sm:$0x3] 0.0
    $region41: #{tpu_custom_call.1} parent=1 // pred_fallthru
      _
    %v87 = vld [vmem:[#allocation5] sm:$0xff]
    %v88 = vld [vmem:[#allocation8] sm:$0xff]
    %v89 = vsub.f32 %v87, %v88
    %v90 = vmul.f32 %v89, %v89
    %s91 = scalar_lea.vmem [#allocation5], 8
    %v92 = vld [vmem:[%s91] sm:$0xff]
    %s93 = scalar_lea.vmem [#allocation8], 8
    %v94 = vld [vmem:[%s93] sm:$0xff]
    %v95 = vsub.f32 %v92, %v94
    %v96 = vmul.f32 %v95, %v95
    %v97 = vadd.f32 %v90, %v96
    %v98 = vrsqrt.pop %v97
    %v99 = vmul.f32 %v98, %v97
    %v100 = vmul.f32 %v99, %v98
    %v101 = vmul.f32 0.5, %v100
    %v102 = vsub.f32 1.5, %v101
    %v103 = vmul.f32 %v98, %v102
    %v104 = vmul.f32 %v97, %v103
    %vm105 = vcmp.eq.f32.partialorder %v97, inf
    %v106 = vsel %vm105, %v97, %v104
    %vm107 = vcmp.eq.f32.partialorder %v97, 0.0
    %v108 = vand.u32 %v97, 2147483648
    %v109 = vsel %vm107, %v108, %v106
    %v110 = vld [vmem:[#allocation10] sm:$0xff]
    %v111 = vrcp.pop %v110
    %v112 = vmul.f32 %v110, %v111
    %v113 = vsub.f32 1.0, %v112
    %v114 = vmul.f32 %v111, %v113
    %v115 = vadd.f32 %v111, %v114
    %vm116 = vweird.f32 %v110
    %vm117 = vweird.f32 %v111
    %vm118 = vmor %vm116, %vm117
    %v119 = vsel %vm118, %v111, %v115
    %v120 = vand.u32 2147483647, %v110
    %vm121 = vcmp.eq.f32.partialorder %v120, 8.507059e+37
    %v122 = vand.u32 %v110, 2147483648
    %v123 = vor.u32 1.1754944e-38, %v122
    %v124 = vsel %vm121, %v123, %v119
    %v125 = vmul.f32 %v109, %v124
    %v126 = vld [vmem:[#allocation11] sm:$0xff]
    %vm127 = vcmp.eq.s32.totalorder %v126, 0
    %v128 = vsel %vm127, 1, 0
    %v129 = vcvt.s32.f32 %v128
    %v130 = vmul.f32 %v129, %v125
    %v131 = vld [vmem:[#allocation2] sm:$0x1]
    %v132 = vrot.slane %v130, 4
    %v133 = vadd.f32 %v130, %v132
    %v134 = vrot.slane %v133, 2
    %v135 = vadd.f32 %v133, %v134
    %v136 = vrot.slane %v135, 1
    %v137 = vadd.f32 %v135, %v136
    %v138 = vadd.f32 %v131, %v137
    %139 = vst [vmem:[#allocation2] sm:$0x1] %v138
    %v140 = vld [vmem:[#allocation3] sm:$0x1]
    %v141 = vmul.f32 %v130, %v125
    %v142 = vrot.slane %v141, 4
    %v143 = vadd.f32 %v141, %v142
    %v144 = vrot.slane %v143, 2
    %v145 = vadd.f32 %v143, %v144
    %v146 = vrot.slane %v145, 1
    %v147 = vadd.f32 %v145, %v146
    %v148 = vadd.f32 %v140, %v147
    %149 = vst [vmem:[#allocation3] sm:$0x1] %v148
    %v150 = vld [vmem:[#allocation4] sm:$0x1]
    %v151 = vrot.slane %v129, 4
    %v152 = vadd.f32 %v129, %v151
    %v153 = vrot.slane %v152, 2
    %v154 = vadd.f32 %v152, %v153
    %v155 = vrot.slane %v154, 1
    %v156 = vadd.f32 %v154, %v155
    %v157 = vadd.f32 %v150, %v156
    %158 = vst [vmem:[#allocation4] sm:$0x1] %v157
    %vm159 = vcmp.eq.s32.totalorder %v126, 1
    %v160 = vsel %vm159, 1, 0
    %v161 = vcvt.s32.f32 %v160
    %v162 = vmul.f32 %v161, %v125
    %v163 = vld [vmem:[#allocation2 + $0x1] sm:$0x1]
    %v164 = vrot.slane %v162, 4
    %v165 = vadd.f32 %v162, %v164
    %v166 = vrot.slane %v165, 2
    %v167 = vadd.f32 %v165, %v166
    %v168 = vrot.slane %v167, 1
    %v169 = vadd.f32 %v167, %v168
    %v170 = vadd.f32 %v163, %v169
    %171 = vst [vmem:[#allocation2 + $0x1] sm:$0x1] %v170
    %v172 = vld [vmem:[#allocation3 + $0x1] sm:$0x1]
    %v173 = vmul.f32 %v162, %v125
    %v174 = vrot.slane %v173, 4
    %v175 = vadd.f32 %v173, %v174
    %v176 = vrot.slane %v175, 2
    %v177 = vadd.f32 %v175, %v176
    %v178 = vrot.slane %v177, 1
    %v179 = vadd.f32 %v177, %v178
    %v180 = vadd.f32 %v172, %v179
    %181 = vst [vmem:[#allocation3 + $0x1] sm:$0x1] %v180
    %v182 = vld [vmem:[#allocation4 + $0x1] sm:$0x1]
    %v183 = vrot.slane %v161, 4
    %v184 = vadd.f32 %v161, %v183
    %v185 = vrot.slane %v184, 2
    %v186 = vadd.f32 %v184, %v185
    %v187 = vrot.slane %v186, 1
    %v188 = vadd.f32 %v186, %v187
    %v189 = vadd.f32 %v182, %v188
    %190 = vst [vmem:[#allocation4 + $0x1] sm:$0x1] %v189
    // Predicated region
    $region42: #{tpu_custom_call.1} parent=1 // pred_check
      %p191 = pneg %p80
    $region43: #{tpu_custom_call.1} parent=1 // pred_check_branch
      %193 = sbr.rel (%p191) target = $region45
    $region44: #{tpu_custom_call.1} parent=1 // pred_region
      %v194 = vld [vmem:[#allocation2] sm:$0x3]
      %vm195 = vcmask 1041408
      %v196 = vsel %vm195, %v194, 0.0
      %197 = vadd.xlane.f32.xlu0 %v196
      %v198 = vpop.xlane.xlu0 %197
      %v199 = vld [vmem:[#allocation3] sm:$0x3]
      %v200 = vsel %vm195, %v199, 0.0
      %201 = vadd.xlane.f32.xlu0 %v200
      %v202 = vpop.xlane.xlu0 %201
      %v203 = vld [vmem:[#allocation4] sm:$0x3]
      %v204 = vsel %vm195, %v203, 0.0
      %205 = vadd.xlane.f32.xlu0 %v204
      %v206 = vpop.xlane.xlu0 %205
      %v207 = vrcp.pop %v198
      %v208 = vmul.f32 %v198, %v207
      %v209 = vsub.f32 1.0, %v208
      %v210 = vmul.f32 %v207, %v209
      %v211 = vadd.f32 %v207, %v210
      %vm212 = vweird.f32 %v198
      %vm213 = vweird.f32 %v207
      %vm214 = vmor %vm212, %vm213
      %v215 = vsel %vm214, %v207, %v211
      %v216 = vand.u32 2147483647, %v198
      %vm217 = vcmp.eq.f32.partialorder %v216, 8.507059e+37
      %v218 = vand.u32 %v198, 2147483648
      %v219 = vor.u32 1.1754944e-38, %v218
      %v220 = vsel %vm217, %v219, %v215
      %v221 = vmul.f32 %v202, %v220
      %v222 = vrcp.pop %v221
      %v223 = vmul.f32 %v221, %v222
      %v224 = vsub.f32 1.0, %v223
      %v225 = vmul.f32 %v222, %v224
      %v226 = vadd.f32 %v222, %v225
      %vm227 = vweird.f32 %v221
      %vm228 = vweird.f32 %v222
      %vm229 = vmor %vm227, %vm228
      %v230 = vsel %vm229, %v222, %v226
      %v231 = vand.u32 2147483647, %v221
      %vm232 = vcmp.eq.f32.partialorder %v231, 8.507059e+37
      %v233 = vand.u32 %v221, 2147483648
      %v234 = vor.u32 1.1754944e-38, %v233
      %v235 = vsel %vm232, %v234, %v230
      %v236 = vmul.f32 1.0, %v235
      %v237 = vmul.f32 %v202, %v236
      %v238 = vmul.f32 %v237, %v236
      %v239 = vmul.f32 %v198, 2.0
      %v240 = vmul.f32 %v239, %v236
      %v241 = vsub.f32 %v238, %v240
      %v242 = vadd.f32 %v241, %v206
      %v243 = vld [vmem:[%s4] sm:$0x3]
      %v244 = vmul.f32 %v243, %v243
      %v245 = vrcp.pop %v244
      %v246 = vmul.f32 %v244, %v245
      %v247 = vsub.f32 1.0, %v246
      %v248 = vmul.f32 %v245, %v247
      %v249 = vadd.f32 %v245, %v248
      %vm250 = vweird.f32 %v244
      %vm251 = vweird.f32 %v245
      %vm252 = vmor %vm250, %vm251
      %v253 = vsel %vm252, %v245, %v249
      %v254 = vand.u32 2147483647, %v244
      %vm255 = vcmp.eq.f32.partialorder %v254, 8.507059e+37
      %v256 = vand.u32 %v244, 2147483648
      %v257 = vor.u32 1.1754944e-38, %v256
      %v258 = vsel %vm255, %v257, %v253
      %v259 = vmul.f32 %v242, %v258
      %vm260 = vcmask 1024
      %v261 = vsel %vm260, %v259, 0.0
      %v262 = vrot.slane %v261, 4
      %v263 = vadd.f32 %v261, %v262
      %v264 = vrot.slane %v263, 2
      %v265 = vadd.f32 %v263, %v264
      %v266 = vrot.slane %v265, 1
      %v267 = vadd.f32 %v265, %v266
      %v268 = vmul.f32 %v267, 0.5
      %vm269 = vcmask 0
      %270 = vst.msk [vmem:[#allocation13] sm:$0x1] %vm269, %v268
    $region45: #{tpu_custom_call.1} parent=1 // pred_fallthru
      _
    // Predicated region
    $region46: #{tpu_custom_call.1} parent=1 // pred_check
      _
    $region47: #{tpu_custom_call.1} parent=1 // pred_check_branch
      %272 = sbr.rel (0) target = $region49
    $region48: #{tpu_custom_call.1} parent=1 // pred_region
      %274 = vsyncadd [#allocation7], 0
      %s276 = sshll.u32 [#allocation13], 4
      %s277 = int_to_ptr.vmem [resolvable:$true] %s276
      %s278 = sshll.u32 %s5, 4
      %s279 = int_to_ptr.hbm [resolvable:$true] %s278
      %281 = dma.vmem_to_hbm [thread:$0]  %s277, 16, %s279, [#allocation7]
    $region49: #{tpu_custom_call.1} parent=1 // pred_fallthru
      _
    // Predicated region
    $region50: #{tpu_custom_call.1} parent=1 // pred_check
      _
    $region51: #{tpu_custom_call.1} parent=1 // pred_check_branch
      %283 = sbr.rel (0) target = $region53
    $region52: #{tpu_custom_call.1} parent=1 // pred_region
      %285 = dma.done [#allocation7], 16
    $region53: #{tpu_custom_call.1} parent=1 // pred_fallthru
      _
    %286 = vsyncpa [#allocation6], 1
    %287 = vsyncpa [#allocation9], 1
    %288 = vsyncpa [#allocation12], 1
    %289 = vsyncpa [#allocation7], 1

</llo_original>
